<compile_context>
chip_gen: v5e
topology: v5e:2x2
jax: 0.10.0
libtpu: 0.0.40
codegen_flags: <defaults>
</compile_context>

<pallas_src>
import jax
import jax.numpy as jnp
from jax.experimental import pallas as pl
from jax.experimental.pallas import tpu as pltpu

N_STATES = 2
N_ACTIONS = 2
HIDDEN = [10, 100, 10]            # same H as the PyTorch module

LANES = 128                       # lane width of activations / weight out-dim
X_LANES = 16                      # input features padded 2 -> 16
SUBLANES = 8
MAX_TILE_B = 1024                 # batch rows per grid step (VMEM-safe on all chips)

# Padded fan-in per layer.  Layer 2 keeps 128 so it consumes the full 128-lane
# activation (its padded rows are zero); layers 0/1/3 use small sublane pads.
PAD_IN = (X_LANES, 16, LANES, 16)


def _qnet_kernel(x_ref,
                 w0_ref, b0_ref,
                 w1_ref, b1_ref,
                 w2_ref, b2_ref,
                 w3_ref, b3_ref,
                 o_ref):
    """Fused 4-layer MLP forward on one (TILE_B, .) batch tile."""
    f32 = jnp.float32
    bf16 = jnp.bfloat16

    # Layer 0: (TILE_B, 16) @ (16, 128); bias is a (1, 128) broadcast row.
    x = x_ref[...].astype(bf16)
    y = jnp.dot(x, w0_ref[...], preferred_element_type=f32) + b0_ref[...]
    y = jnp.maximum(y, 0.0)

    # Layer 1: only lanes [0, 16) of y can be non-zero (fan_in = 10).
    y = jnp.dot(y[:, :PAD_IN[1]].astype(bf16), w1_ref[...],
                preferred_element_type=f32) + b1_ref[...]
    y = jnp.maximum(y, 0.0)

    # Layer 2: fan_in = 100; contract over all 128 lanes (rows >= 100 of w2 are 0).
    y = jnp.dot(y.astype(bf16), w2_ref[...],
                preferred_element_type=f32) + b2_ref[...]
    y = jnp.maximum(y, 0.0)

    # Output layer (no ReLU).
    y = jnp.dot(y[:, :PAD_IN[3]].astype(bf16), w3_ref[...],
                preferred_element_type=f32) + b3_ref[...]

    o_ref[...] = y.astype(o_ref.dtype)


def init_params(key):
    """Deterministic init mimicking torch.nn.Linear (U(-1/sqrt(fan_in), +))."""
    dims = [N_STATES] + HIDDEN + [N_ACTIONS]   # [2, 10, 100, 10, 2]
    params = []
    for fan_in, fan_out in zip(dims[:-1], dims[1:]):
        key, kw, kb = jax.random.split(key, 3)
        bound = 1.0 / jnp.sqrt(jnp.float32(fan_in))
        # stored as [in, out]  (== torch weight.T)
        w = jax.random.uniform(kw, (fan_in, fan_out), jnp.float32, -bound, bound)
        b = jax.random.uniform(kb, (fan_out,), jnp.float32, -bound, bound)
        params.append((w, b))
    return params


def prepare_params(params):
    """Pad + cast the (W, b) pairs ONCE.  Call outside the inference loop."""
    assert len(params) == len(PAD_IN)
    prepared = []
    for (w, b), pin in zip(params, PAD_IN):
        wp = jnp.zeros((pin, LANES), jnp.float32)
        wp = wp.at[: w.shape[0], : w.shape[1]].set(w).astype(jnp.bfloat16)
        bp = jnp.zeros((1, LANES), jnp.float32).at[0, : b.shape[0]].set(b)
        prepared.append((wp, bp))
    return prepared


def _round_up(v, m):
    return ((v + m - 1) // m) * m


@jax.jit
def qnetwork_forward(x, prepared_params):
    """x: [B, N_STATES] float32 -> [B, N_ACTIONS] float32."""
    batch = x.shape[0]
    tile_b = min(MAX_TILE_B, _round_up(batch, SUBLANES))
    pb = _round_up(batch, tile_b)

    # Pad batch -> pb and features 2 -> X_LANES (zeros are inert through the
    # zero-padded weight rows).
    x_p = jnp.zeros((pb, X_LANES), jnp.float32).at[:batch, :N_STATES].set(x)

    flat_inputs = [x_p]
    in_specs = [pl.BlockSpec((tile_b, X_LANES), lambda i: (i, 0))]
    for w, b in prepared_params:
        flat_inputs += [w, b]
        in_specs += [pl.BlockSpec(w.shape, lambda i: (0, 0)),    # resident
                     pl.BlockSpec(b.shape, lambda i: (0, 0))]    # resident

    out_p = pl.pallas_call(
        _qnet_kernel,
        out_shape=jax.ShapeDtypeStruct((pb, LANES), jnp.float32),
        grid=(pb // tile_b,),
        in_specs=in_specs,
        out_specs=pl.BlockSpec((tile_b, LANES), lambda i: (i, 0)),
        compiler_params=pltpu.CompilerParams(
            dimension_semantics=("parallel",)),
    )(*flat_inputs)

    return out_p[:batch, :N_ACTIONS]


def reference_forward(x, params, weight_dtype=jnp.float32):
    """Pure-JAX reference.  weight_dtype=bfloat16 mimics the kernel's quantized
    matmuls (f32 accumulation, f32 bias/ReLU) for a tight comparison."""
    y = x
    n = len(params)
    for i, (w, b) in enumerate(params):
        w_q = w.astype(weight_dtype).astype(jnp.float32)
        y_q = y.astype(weight_dtype).astype(jnp.float32)
        y = y_q @ w_q + b
        if i < n - 1:
            y = jnp.maximum(y, 0.0)
    return y


# TODO(synk): fit_once (MSELoss + SGD step) is a training op and is not
# implemented here; only the forward pass is translated.

if __name__ == "__main__":
    key = jax.random.PRNGKey(0)
    kp, kx1, kx2 = jax.random.split(key, 3)
    params = init_params(kp)
    prepared = prepare_params(params)   # pad + bf16-cast once

    for batch, kx in ((8, kx1), (37, kx2)):
        x = jax.random.normal(kx, (batch, N_STATES), jnp.float32)

        out = jax.block_until_ready(qnetwork_forward(x, prepared))
        assert out.shape == (batch, N_ACTIONS), out.shape

        # Tight check against a reference that applies the same bf16 weight /
        # activation rounding (isolates kernel correctness).
        ref_q = reference_forward(x, params, weight_dtype=jnp.bfloat16)
        assert jnp.allclose(out, ref_q, atol=1e-4, rtol=1e-4), (
            float(jnp.max(jnp.abs(out - ref_q))), out, ref_q)

        # Looser check against the full-f32 PyTorch-equivalent forward
        # (tolerance set by bf16 weight precision).
        ref = reference_forward(x, params)
        assert jnp.allclose(out, ref, atol=5e-2, rtol=5e-2), (
            float(jnp.max(jnp.abs(out - ref))), out, ref)

    print("KERNEL_OK")
</pallas_src>

<mosaic_0001>
module attributes {stable_mosaic.version = 11 : i64} {
  func.func @_qnet_kernel(%arg0: i32, %arg1: memref<8x16xf32, #tpu.memory_space<vmem>>, %arg2: memref<16x128xbf16, #tpu.memory_space<vmem>>, %arg3: memref<1x128xf32, #tpu.memory_space<vmem>>, %arg4: memref<16x128xbf16, #tpu.memory_space<vmem>>, %arg5: memref<1x128xf32, #tpu.memory_space<vmem>>, %arg6: memref<128x128xbf16, #tpu.memory_space<vmem>>, %arg7: memref<1x128xf32, #tpu.memory_space<vmem>>, %arg8: memref<16x128xbf16, #tpu.memory_space<vmem>>, %arg9: memref<1x128xf32, #tpu.memory_space<vmem>>, %arg10: memref<8x128xf32, #tpu.memory_space<vmem>>) attributes {dimension_semantics = [#tpu.dimension_semantics<parallel>], iteration_bounds = array<i64: 1>, scalar_prefetch = 0 : i64, scratch_operands = 0 : i64, tpu.core_type = #tpu.core_type<tc>, window_params = [{transform_indices = @transform_0, window_bounds = array<i64: 8, 16>}, {pipeline_mode = #tpu.pipeline_mode<synchronous>, transform_indices = @transform_1, window_bounds = array<i64: 16, 128>}, {pipeline_mode = #tpu.pipeline_mode<synchronous>, transform_indices = @transform_2, window_bounds = array<i64: 1, 128>}, {pipeline_mode = #tpu.pipeline_mode<synchronous>, transform_indices = @transform_3, window_bounds = array<i64: 16, 128>}, {pipeline_mode = #tpu.pipeline_mode<synchronous>, transform_indices = @transform_4, window_bounds = array<i64: 1, 128>}, {pipeline_mode = #tpu.pipeline_mode<synchronous>, transform_indices = @transform_5, window_bounds = array<i64: 128, 128>}, {pipeline_mode = #tpu.pipeline_mode<synchronous>, transform_indices = @transform_6, window_bounds = array<i64: 1, 128>}, {pipeline_mode = #tpu.pipeline_mode<synchronous>, transform_indices = @transform_7, window_bounds = array<i64: 16, 128>}, {pipeline_mode = #tpu.pipeline_mode<synchronous>, transform_indices = @transform_8, window_bounds = array<i64: 1, 128>}, {transform_indices = @transform_9, window_bounds = array<i64: 8, 128>}]} {
    %c0 = arith.constant 0 : index
    %c0_0 = arith.constant 0 : index
    %0 = vector.load %arg1[%c0, %c0_0] : memref<8x16xf32, #tpu.memory_space<vmem>>, vector<8x16xf32>
    %1 = arith.truncf %0 : vector<8x16xf32> to vector<8x16xbf16>
    %c0_1 = arith.constant 0 : index
    %c0_2 = arith.constant 0 : index
    %2 = vector.load %arg2[%c0_1, %c0_2] : memref<16x128xbf16, #tpu.memory_space<vmem>>, vector<16x128xbf16>
    %cst = arith.constant dense<0.000000e+00> : vector<8x128xf32>
    %3 = tpu.matmul %1, %2, %cst {dimension_numbers = #tpu.dot_dimension_numbers<[1], [0], [0], [1], [0, 0, 1, 1], [], []>} : vector<8x16xbf16>, vector<16x128xbf16>, vector<8x128xf32> -> vector<8x128xf32>
    %c0_3 = arith.constant 0 : index
    %c0_4 = arith.constant 0 : index
    %4 = vector.load %arg3[%c0_3, %c0_4] : memref<1x128xf32, #tpu.memory_space<vmem>>, vector<1x128xf32>
    %5 = vector.broadcast %4 : vector<1x128xf32> to vector<8x128xf32>
    %6 = arith.addf %3, %5 : vector<8x128xf32>
    %cst_5 = arith.constant 0.000000e+00 : f32
    %7 = vector.broadcast %cst_5 : f32 to vector<8x128xf32>
    %8 = arith.maximumf %6, %7 : vector<8x128xf32>
    %9 = vector.extract_strided_slice %8 {offsets = [0, 0], sizes = [8, 16], strides = [1, 1]} : vector<8x128xf32> to vector<8x16xf32>
    %10 = arith.truncf %9 : vector<8x16xf32> to vector<8x16xbf16>
    %c0_6 = arith.constant 0 : index
    %c0_7 = arith.constant 0 : index
    %11 = vector.load %arg4[%c0_6, %c0_7] : memref<16x128xbf16, #tpu.memory_space<vmem>>, vector<16x128xbf16>
    %cst_8 = arith.constant dense<0.000000e+00> : vector<8x128xf32>
    %12 = tpu.matmul %10, %11, %cst_8 {dimension_numbers = #tpu.dot_dimension_numbers<[1], [0], [0], [1], [0, 0, 1, 1], [], []>} : vector<8x16xbf16>, vector<16x128xbf16>, vector<8x128xf32> -> vector<8x128xf32>
    %c0_9 = arith.constant 0 : index
    %c0_10 = arith.constant 0 : index
    %13 = vector.load %arg5[%c0_9, %c0_10] : memref<1x128xf32, #tpu.memory_space<vmem>>, vector<1x128xf32>
    %14 = vector.broadcast %13 : vector<1x128xf32> to vector<8x128xf32>
    %15 = arith.addf %12, %14 : vector<8x128xf32>
    %cst_11 = arith.constant 0.000000e+00 : f32
    %16 = vector.broadcast %cst_11 : f32 to vector<8x128xf32>
    %17 = arith.maximumf %15, %16 : vector<8x128xf32>
    %18 = arith.truncf %17 : vector<8x128xf32> to vector<8x128xbf16>
    %c0_12 = arith.constant 0 : index
    %c0_13 = arith.constant 0 : index
    %19 = vector.load %arg6[%c0_12, %c0_13] : memref<128x128xbf16, #tpu.memory_space<vmem>>, vector<128x128xbf16>
    %cst_14 = arith.constant dense<0.000000e+00> : vector<8x128xf32>
    %20 = tpu.matmul %18, %19, %cst_14 {dimension_numbers = #tpu.dot_dimension_numbers<[1], [0], [0], [1], [0, 0, 1, 1], [], []>} : vector<8x128xbf16>, vector<128x128xbf16>, vector<8x128xf32> -> vector<8x128xf32>
    %c0_15 = arith.constant 0 : index
    %c0_16 = arith.constant 0 : index
    %21 = vector.load %arg7[%c0_15, %c0_16] : memref<1x128xf32, #tpu.memory_space<vmem>>, vector<1x128xf32>
    %22 = vector.broadcast %21 : vector<1x128xf32> to vector<8x128xf32>
    %23 = arith.addf %20, %22 : vector<8x128xf32>
    %cst_17 = arith.constant 0.000000e+00 : f32
    %24 = vector.broadcast %cst_17 : f32 to vector<8x128xf32>
    %25 = arith.maximumf %23, %24 : vector<8x128xf32>
    %26 = vector.extract_strided_slice %25 {offsets = [0, 0], sizes = [8, 16], strides = [1, 1]} : vector<8x128xf32> to vector<8x16xf32>
    %27 = arith.truncf %26 : vector<8x16xf32> to vector<8x16xbf16>
    %c0_18 = arith.constant 0 : index
    %c0_19 = arith.constant 0 : index
    %28 = vector.load %arg8[%c0_18, %c0_19] : memref<16x128xbf16, #tpu.memory_space<vmem>>, vector<16x128xbf16>
    %cst_20 = arith.constant dense<0.000000e+00> : vector<8x128xf32>
    %29 = tpu.matmul %27, %28, %cst_20 {dimension_numbers = #tpu.dot_dimension_numbers<[1], [0], [0], [1], [0, 0, 1, 1], [], []>} : vector<8x16xbf16>, vector<16x128xbf16>, vector<8x128xf32> -> vector<8x128xf32>
    %c0_21 = arith.constant 0 : index
    %c0_22 = arith.constant 0 : index
    %30 = vector.load %arg9[%c0_21, %c0_22] : memref<1x128xf32, #tpu.memory_space<vmem>>, vector<1x128xf32>
    %31 = vector.broadcast %30 : vector<1x128xf32> to vector<8x128xf32>
    %32 = arith.addf %29, %31 : vector<8x128xf32>
    %c0_23 = arith.constant 0 : index
    %c0_24 = arith.constant 0 : index
    %33 = vector.load %arg10[%c0_23, %c0_24] : memref<8x128xf32, #tpu.memory_space<vmem>>, vector<8x128xf32>
    tpu.vector_store %arg10[%c0_23, %c0_24], %32 {strides = array<i32>} : memref<8x128xf32, #tpu.memory_space<vmem>>, vector<8x128xf32>,
    return
  }
  func.func @transform_0(%arg0: i32) -> (i32, i32) {
    %c0_i32 = arith.constant 0 : i32
    %c0_i32_0 = arith.constant 0 : i32
    return %arg0, %c0_i32 : i32, i32
  }
  func.func @transform_1(%arg0: i32) -> (i32, i32) {
    %c0_i32 = arith.constant 0 : i32
    %c0_i32_0 = arith.constant 0 : i32
    %c0_i32_1 = arith.constant 0 : i32
    return %c0_i32, %c0_i32_0 : i32, i32
  }
  func.func @transform_2(%arg0: i32) -> (i32, i32) {
    %c0_i32 = arith.constant 0 : i32
    %c0_i32_0 = arith.constant 0 : i32
    %c0_i32_1 = arith.constant 0 : i32
    return %c0_i32, %c0_i32_0 : i32, i32
  }
  func.func @transform_3(%arg0: i32) -> (i32, i32) {
    %c0_i32 = arith.constant 0 : i32
    %c0_i32_0 = arith.constant 0 : i32
    %c0_i32_1 = arith.constant 0 : i32
    return %c0_i32, %c0_i32_0 : i32, i32
  }
  func.func @transform_4(%arg0: i32) -> (i32, i32) {
    %c0_i32 = arith.constant 0 : i32
    %c0_i32_0 = arith.constant 0 : i32
    %c0_i32_1 = arith.constant 0 : i32
    return %c0_i32, %c0_i32_0 : i32, i32
  }
  func.func @transform_5(%arg0: i32) -> (i32, i32) {
    %c0_i32 = arith.constant 0 : i32
    %c0_i32_0 = arith.constant 0 : i32
    %c0_i32_1 = arith.constant 0 : i32
    return %c0_i32, %c0_i32_0 : i32, i32
  }
  func.func @transform_6(%arg0: i32) -> (i32, i32) {
    %c0_i32 = arith.constant 0 : i32
    %c0_i32_0 = arith.constant 0 : i32
    %c0_i32_1 = arith.constant 0 : i32
    return %c0_i32, %c0_i32_0 : i32, i32
  }
  func.func @transform_7(%arg0: i32) -> (i32, i32) {
    %c0_i32 = arith.constant 0 : i32
    %c0_i32_0 = arith.constant 0 : i32
    %c0_i32_1 = arith.constant 0 : i32
    return %c0_i32, %c0_i32_0 : i32, i32
  }
  func.func @transform_8(%arg0: i32) -> (i32, i32) {
    %c0_i32 = arith.constant 0 : i32
    %c0_i32_0 = arith.constant 0 : i32
    %c0_i32_1 = arith.constant 0 : i32
    return %c0_i32, %c0_i32_0 : i32, i32
  }
  func.func @transform_9(%arg0: i32) -> (i32, i32) {
    %c0_i32 = arith.constant 0 : i32
    %c0_i32_0 = arith.constant 0 : i32
    return %arg0, %c0_i32 : i32, i32
  }
}

</mosaic_0001>

<llo_original>
// kernel: qnetwork_forward.1
$region0: #{qnetwork_forward.1}
  #allocation0 [shape = 'u32[]', space=smem, size = 0x4, offset = 0x4, fixed_abs, tag = 'smem constant byte address 0x4 - core index']
  #allocation1 [shape = 'u32[72,128]{1,0:T(1,128)}', space=vmem, size = 0x9000, scoped, tag = 'internal scratch']
  %s0 = inlined_call_operand.vmem [shape: f32[8,16], index: 0, kind: input, shape index: {}]
  %s1 = inlined_call_operand.vmem [shape: bf16[16,128], index: 1, kind: input, shape index: {}]
  %s2 = inlined_call_operand.vmem [shape: f32[1,128], index: 2, kind: input, shape index: {}]
  %s3 = inlined_call_operand.vmem [shape: bf16[16,128], index: 3, kind: input, shape index: {}]
  %s4 = inlined_call_operand.vmem [shape: f32[1,128], index: 4, kind: input, shape index: {}]
  %s5 = inlined_call_operand.hbm [shape: bf16[128,128], index: 5, kind: input, shape index: {}]
  %s6 = inlined_call_operand.vmem [shape: f32[1,128], index: 6, kind: input, shape index: {}]
  %s7 = inlined_call_operand.vmem [shape: bf16[16,128], index: 7, kind: input, shape index: {}]
  %s8 = inlined_call_operand.vmem [shape: f32[1,128], index: 8, kind: input, shape index: {}]
  %s9 = inlined_call_operand.vmem [shape: f32[8,128], index: 9, kind: output, shape index: {}]
  %s10 = sld [smem:[#allocation0]]
  $region50: #{qnetwork_forward.1} parent=0
    _
  %s12 = ssub.s32 1, %s10
  %s13 = scalar_select 0, %s12, %s10
  $region1: #{qnetwork_forward.1} parent=0
    #allocation2 [shape = 'u8[32768]{0}', space=vmem, size = 0x8000, scoped, tag = 'input window, operand 5, single buffered']
    #allocation3 [shape = 's32[1]{0}', space=sflag, size = 0x4, scoped, tag = 'scoped memory for qnetwork_forward.1']
    %14 = vsyncpa [#allocation3], 0
    // Predicated region
    $region2: #{qnetwork_forward.1} parent=1 // pred_check
      _
    $region3: #{qnetwork_forward.1} parent=1 // pred_check_branch
      %16 = sbr.rel (0) target = $region5
    $region4: #{qnetwork_forward.1} parent=1 // pred_region
      _
    $region5: #{qnetwork_forward.1} parent=1 // pred_fallthru
      _
    // Predicated region
    $region6: #{qnetwork_forward.1} parent=1 // pred_check
      _
    $region7: #{qnetwork_forward.1} parent=1 // pred_check_branch
      %18 = sbr.rel (0) target = $region9
    $region8: #{qnetwork_forward.1} parent=1 // pred_region
      _
    $region9: #{qnetwork_forward.1} parent=1 // pred_fallthru
      _
    // Predicated region
    $region10: #{qnetwork_forward.1} parent=1 // pred_check
      _
    $region11: #{qnetwork_forward.1} parent=1 // pred_check_branch
      %20 = sbr.rel (0) target = $region13
    $region12: #{qnetwork_forward.1} parent=1 // pred_region
      _
    $region13: #{qnetwork_forward.1} parent=1 // pred_fallthru
      _
    // Predicated region
    $region14: #{qnetwork_forward.1} parent=1 // pred_check
      _
    $region15: #{qnetwork_forward.1} parent=1 // pred_check_branch
      %22 = sbr.rel (0) target = $region17
    $region16: #{qnetwork_forward.1} parent=1 // pred_region
      _
    $region17: #{qnetwork_forward.1} parent=1 // pred_fallthru
      _
    // Predicated region
    $region18: #{qnetwork_forward.1} parent=1 // pred_check
      _
    $region19: #{qnetwork_forward.1} parent=1 // pred_check_branch
      %24 = sbr.rel (0) target = $region21
    $region20: #{qnetwork_forward.1} parent=1 // pred_region
      _
    $region21: #{qnetwork_forward.1} parent=1 // pred_fallthru
      _
    // Predicated region
    $region22: #{qnetwork_forward.1} parent=1 // pred_check
      _
    $region23: #{qnetwork_forward.1} parent=1 // pred_check_branch
      %26 = sbr.rel (0) target = $region25
    $region24: #{qnetwork_forward.1} parent=1 // pred_region
      %28 = vsyncadd [#allocation3], 0
      %s29 = sshll.u32 %s5, 4
      %s30 = int_to_ptr.hbm [resolvable:$true] %s29
      %s31 = sshll.u32 [#allocation2], 4
      %s32 = int_to_ptr.vmem [resolvable:$true] %s31
      %37 = dma.hbm_to_vmem [thread:$0]  %s30, 1024, %s32, [#allocation3], 64, 64, 4
    $region25: #{qnetwork_forward.1} parent=1 // pred_fallthru
      _
    // Predicated region
    $region26: #{qnetwork_forward.1} parent=1 // pred_check
      _
    $region27: #{qnetwork_forward.1} parent=1 // pred_check_branch
      %39 = sbr.rel (0) target = $region29
    $region28: #{qnetwork_forward.1} parent=1 // pred_region
      _
    $region29: #{qnetwork_forward.1} parent=1 // pred_fallthru
      _
    // Predicated region
    $region30: #{qnetwork_forward.1} parent=1 // pred_check
      _
    $region31: #{qnetwork_forward.1} parent=1 // pred_check_branch
      %41 = sbr.rel (0) target = $region33
    $region32: #{qnetwork_forward.1} parent=1 // pred_region
      _
    $region33: #{qnetwork_forward.1} parent=1 // pred_fallthru
      _
    // Predicated region
    $region34: #{qnetwork_forward.1} parent=1 // pred_check
      _
    $region35: #{qnetwork_forward.1} parent=1 // pred_check_branch
      %43 = sbr.rel (0) target = $region37
    $region36: #{qnetwork_forward.1} parent=1 // pred_region
      _
    $region37: #{qnetwork_forward.1} parent=1 // pred_fallthru
      _
    // Predicated region
    $region38: #{qnetwork_forward.1} parent=1 // pred_check
      _
    $region39: #{qnetwork_forward.1} parent=1 // pred_check_branch
      %45 = sbr.rel (0) target = $region41
    $region40: #{qnetwork_forward.1} parent=1 // pred_region
      %47 = dma.done [#allocation3], 1024
    $region41: #{qnetwork_forward.1} parent=1 // pred_fallthru
      _
    %v49 = vld [vmem:[%s0] sm:$0xff]
    %v50 = vpack.c.bf16 %v49, %v49
    %v51 = vld [vmem:[%s1] sm:$0xf]
    %v52 = vld [vmem:[%s1 + $0x4] sm:$0xf]
    %v53 = vld [vmem:[%s2] sm:$0x1]
    %v55 = vperm.slane %v53, 0
    %v59 = vunpack.c.l.b16 %v51
    %v60 = vunpack.c.l.b16 %v52
    %v61 = vpack.c.b16 %v60, %v59
    %vm63 = vcmask 130048
    %v65 = vsel %vm63, %v50, 0
    %67 = vmatpush.bf16.msra.mxu0 0
    %68 = vmatpush.bf16.msra.mxu0 0
    %69 = vmatpush.bf16.msra.mxu0 0
    %70 = vmatpush.bf16.msra.mxu0 0
    %71 = vmatpush.bf16.msra.mxu0 0
    %72 = vmatpush.bf16.msra.mxu0 0
    %73 = vmatpush.bf16.msra.mxu0 0
    %74 = vmatpush.bf16.msra.mxu0 %v61
    %75 = vmatmul.bf16.gmra.mxu0 %v65
    %v76 = vpop.f32.mrf.mxu0
    %v77 = vadd.f32 %v55, %v76
    %v78 = vpop.f32.mrf.mxu0
    %79 = vdwg.mxu0
    %v80 = vmax.f32 %v77, 0.0
    %v81 = vpack.c.bf16 %v80, %v80
    %v82 = vld [vmem:[%s3] sm:$0xf]
    %v83 = vld [vmem:[%s3 + $0x4] sm:$0xf]
    %v84 = vld [vmem:[%s4] sm:$0x1]
    %v86 = vperm.slane %v84, 0
    %v90 = vunpack.c.l.b16 %v82
    %v91 = vunpack.c.l.b16 %v83
    %v92 = vpack.c.b16 %v91, %v90
    %v95 = vsel %vm63, %v81, 0
    %97 = vmatpush.bf16.msra.mxu0 0
    %98 = vmatpush.bf16.msra.mxu0 0
    %99 = vmatpush.bf16.msra.mxu0 0
    %100 = vmatpush.bf16.msra.mxu0 0
    %101 = vmatpush.bf16.msra.mxu0 0
    %102 = vmatpush.bf16.msra.mxu0 0
    %103 = vmatpush.bf16.msra.mxu0 0
    %104 = vmatpush.bf16.msra.mxu0 %v92
    %105 = vmatmul.bf16.gmra.mxu0 %v95
    %v106 = vpop.f32.mrf.mxu0
    %v107 = vadd.f32 %v86, %v106
    %v108 = vpop.f32.mrf.mxu0
    %109 = vdwg.mxu0
    %v110 = vmax.f32 %v107, 0.0
    %v111 = vpack.c.bf16 %v110, %v110
    %v112 = vld [vmem:[#allocation2] sm:$0xf]
    %v113 = vld [vmem:[#allocation2 + $0x4] sm:$0xf]
    %v114 = vld [vmem:[#allocation2 + $0x8] sm:$0xf]
    %v115 = vld [vmem:[#allocation2 + $0xc] sm:$0xf]
    %v116 = vld [vmem:[#allocation2 + $0x10] sm:$0xf]
    %v117 = vld [vmem:[#allocation2 + $0x14] sm:$0xf]
    %v118 = vld [vmem:[#allocation2 + $0x18] sm:$0xf]
    %v119 = vld [vmem:[#allocation2 + $0x1c] sm:$0xf]
    %v120 = vld [vmem:[#allocation2 + $0x20] sm:$0xf]
    %v121 = vld [vmem:[#allocation2 + $0x24] sm:$0xf]
    %v122 = vld [vmem:[#allocation2 + $0x28] sm:$0xf]
    %v123 = vld [vmem:[#allocation2 + $0x2c] sm:$0xf]
    %v124 = vld [vmem:[#allocation2 + $0x30] sm:$0xf]
    %v125 = vld [vmem:[#allocation2 + $0x34] sm:$0xf]
    %v126 = vld [vmem:[#allocation2 + $0x38] sm:$0xf]
    %v127 = vld [vmem:[#allocation2 + $0x3c] sm:$0xf]
    %v128 = vld [vmem:[%s6] sm:$0x1]
    %v130 = vperm.slane %v128, 0
    %v148 = vunpack.c.l.b16 %v112
    %v149 = vunpack.c.l.b16 %v113
    %v150 = vunpack.c.l.b16 %v114
    %v151 = vunpack.c.l.b16 %v115
    %v152 = vunpack.c.l.b16 %v116
    %v153 = vunpack.c.l.b16 %v117
    %v154 = vunpack.c.l.b16 %v118
    %v155 = vunpack.c.l.b16 %v119
    %v156 = vunpack.c.l.b16 %v120
    %v157 = vunpack.c.l.b16 %v121
    %v158 = vunpack.c.l.b16 %v122
    %v159 = vunpack.c.l.b16 %v123
    %v160 = vunpack.c.l.b16 %v124
    %v161 = vunpack.c.l.b16 %v125
    %v162 = vunpack.c.l.b16 %v126
    %v163 = vunpack.c.l.b16 %v127
    %v164 = vpack.c.b16 %v149, %v148
    %v165 = vpack.c.b16 %v151, %v150
    %v166 = vpack.c.b16 %v153, %v152
    %v167 = vpack.c.b16 %v155, %v154
    %v168 = vpack.c.b16 %v157, %v156
    %v169 = vpack.c.b16 %v159, %v158
    %v170 = vpack.c.b16 %v161, %v160
    %v171 = vpack.c.b16 %v163, %v162
    %180 = vmatpush.bf16.msra.mxu0 %v171
    %181 = vmatpush.bf16.msra.mxu0 %v170
    %182 = vmatpush.bf16.msra.mxu0 %v169
    %183 = vmatpush.bf16.msra.mxu0 %v168
    %184 = vmatpush.bf16.msra.mxu0 %v167
    %185 = vmatpush.bf16.msra.mxu0 %v166
    %186 = vmatpush.bf16.msra.mxu0 %v165
    %187 = vmatpush.bf16.msra.mxu0 %v164
    %188 = vmatmul.bf16.gmra.mxu0 %v111
    %v189 = vpop.f32.mrf.mxu0
    %v190 = vadd.f32 %v130, %v189
    %v191 = vpop.f32.mrf.mxu0
    %192 = vdwg.mxu0
    %v193 = vmax.f32 %v190, 0.0
    %v194 = vpack.c.bf16 %v193, %v193
    %v195 = vld [vmem:[%s7] sm:$0xf]
    %v196 = vld [vmem:[%s7 + $0x4] sm:$0xf]
    %v197 = vld [vmem:[%s8] sm:$0x1]
    %v199 = vperm.slane %v197, 0
    %v203 = vunpack.c.l.b16 %v195
    %v204 = vunpack.c.l.b16 %v196
    %v205 = vpack.c.b16 %v204, %v203
    %v208 = vsel %vm63, %v194, 0
    %210 = vmatpush.bf16.msra.mxu0 0
    %211 = vmatpush.bf16.msra.mxu0 0
    %212 = vmatpush.bf16.msra.mxu0 0
    %213 = vmatpush.bf16.msra.mxu0 0
    %214 = vmatpush.bf16.msra.mxu0 0
    %215 = vmatpush.bf16.msra.mxu0 0
    %216 = vmatpush.bf16.msra.mxu0 0
    %217 = vmatpush.bf16.msra.mxu0 %v205
    %218 = vmatmul.bf16.gmra.mxu0 %v208
    %v219 = vpop.f32.mrf.mxu0
    %v220 = vadd.f32 %v199, %v219
    %v221 = vpop.f32.mrf.mxu0
    %222 = vdwg.mxu0
    %223 = vst [vmem:[%s9] sm:$0xff] %v220
    // Predicated region
    $region42: #{qnetwork_forward.1} parent=1 // pred_check
      _
    $region43: #{qnetwork_forward.1} parent=1 // pred_check_branch
      %225 = sbr.rel (0) target = $region45
    $region44: #{qnetwork_forward.1} parent=1 // pred_region
      _
    $region45: #{qnetwork_forward.1} parent=1 // pred_fallthru
      _
    // Predicated region
    $region46: #{qnetwork_forward.1} parent=1 // pred_check
      _
    $region47: #{qnetwork_forward.1} parent=1 // pred_check_branch
      %227 = sbr.rel (0) target = $region49
    $region48: #{qnetwork_forward.1} parent=1 // pred_region
      _
    $region49: #{qnetwork_forward.1} parent=1 // pred_fallthru
      _
    %228 = vsyncpa [#allocation3], 1

</llo_original>
